<compile_context>
chip_gen: v7x
topology: tpu7x:2x2x1
jax: 0.10.0
libtpu: 0.0.40
codegen_flags: <defaults>
</compile_context>

<pallas_src>
import functools

import jax
import jax.numpy as jnp
from jax.experimental import pallas as pl
from jax.experimental.pallas import tpu as pltpu


def _seg_loss_kernel(logits_ref, tgt_ref, w_ref, out_ref, *acc,
                     n_points, tile_n, gamma, masked, point_stride, single_tile):
    """One (TB, C, TN) class-major block: log-softmax over classes (sublane axis),
    target gather via one-hot, fused (3, TN) partial sums."""
    t = pl.program_id(1)

    logits = logits_ref[...].astype(jnp.float32)            # (TB, C, TN)
    tgt = tgt_ref[...].astype(jnp.int32)                    # (TB, 1, TN)
    w = w_ref[...].reshape(1, -1, 1)                        # (1, C, 1)
    tb, c, tn = logits.shape

    # numerically-stable log-softmax over the class (sublane) axis
    mx = jnp.max(logits, axis=1, keepdims=True)             # (TB, 1, TN)
    shifted = logits - mx
    exp_shifted = jnp.exp(shifted)                          # single exp per tile
    sumexp = jnp.sum(exp_shifted, axis=1, keepdims=True)    # (TB, 1, TN)
    lse = jnp.log(sumexp)

    # "gather" target logit / prob / class weight via a one-hot mask (TPU friendly)
    cls = jax.lax.broadcasted_iota(jnp.int32, (tb, c, tn), 1)
    onehot = (cls == tgt).astype(jnp.float32)               # (TB, C, TN)
    shifted_t = jnp.sum(shifted * onehot, axis=1, keepdims=True)
    exp_t = jnp.sum(exp_shifted * onehot, axis=1, keepdims=True)
    w_t = jnp.sum(w * onehot, axis=1, keepdims=True)        # alpha[target]

    nll = lse - shifted_t                                   # -log p_t
    p_t = exp_t / sumexp                                    # reuses exp_shifted

    # focal modulation (1 - p_t)**gamma; integer gamma -> repeated VPU multiply
    base = jnp.maximum(1.0 - p_t, 0.0)
    g = float(gamma)
    if g == 0.0:
        focal = jnp.ones_like(p_t)                          # exact (1-p)**0 == 1
    elif g.is_integer() and 1 <= int(g) <= 8:
        focal = base
        for _ in range(int(g) - 1):
            focal = focal * base
    else:
        # TODO(synk): fine for forward; if a backward pass is added, 0<gamma<1 has
        # an infinite gradient at p_t == 1.
        focal = jnp.power(base, jnp.float32(g))

    wnll = w_t * nll
    wsum = w_t
    if masked:  # only emitted at trace time when the point axis was padded
        gidx = pl.program_id(0)
        col = ((point_stride * gidx + t) * tile_n
               + jax.lax.broadcasted_iota(jnp.int32, (1, 1, tn), 2))
        valid = (col < n_points).astype(jnp.float32)
        wnll = wnll * valid
        wsum = wsum * valid
        focal = focal * valid

    # one fused (3, TN) partial: row0 = sum w*nll, row1 = sum w, row2 = sum focal
    part = jnp.concatenate(
        [jnp.sum(wnll, axis=0), jnp.sum(wsum, axis=0), jnp.sum(focal, axis=0)],
        axis=0)                                             # (3, TN)

    if single_tile:
        # whole point axis in one tile: no accumulator round-trip needed
        out_ref[...] = jnp.sum(part, axis=1, keepdims=True)
    else:
        acc_ref = acc[0]

        @pl.when(t == 0)
        def _init():
            acc_ref[...] = part                             # assign (no zero-init)

        @pl.when(t > 0)
        def _accum():
            acc_ref[...] += part                            # single RMW per step

        @pl.when(t == pl.num_programs(1) - 1)
        def _finalize():
            out_ref[...] = jnp.sum(acc_ref[...], axis=1, keepdims=True)   # (3, 1)


def _pick_tiles(B, C, N, target_block_bytes):
    """Choose (batch_block TB, point_tile TN, n_point_tiles) so one grid step
    streams roughly `target_block_bytes` of logits (amortizes ~0.35us/step
    pipeline overhead) while staying far below VMEM."""
    logit_bytes_per_pt = C * 4
    if N * logit_bytes_per_pt <= target_block_bytes:
        TN = N                                              # whole point axis, one tile
    else:
        cap = max(128, (target_block_bytes // logit_bytes_per_pt) // 128 * 128)
        TN = 0
        for cand in range(cap, 127, -128):                  # largest 128-mult divisor
            if N % cand == 0:
                TN = cand
                break
        if TN == 0:
            TN = cap                                        # no divisor: pad + mask
    n_tiles = pl.cdiv(N, TN)

    if n_tiles == 1:
        # grow the batch block up to the byte budget; keep >= 2 outer ("parallel")
        # groups when B >= 2 so both v7x TensorCores get work
        budget = max(1, target_block_bytes // (C * TN * 4))
        tb_cap = min(B, budget, max(1, B // 2)) if B >= 2 else 1
        tb_cap = max(1, tb_cap)
        TB = max(d for d in range(1, tb_cap + 1) if B % d == 0)
    else:
        TB = 1                                              # point blocks already large
    return TB, TN, n_tiles


def pointnet_seg_loss(predictions, targets, *, alpha=None, gamma=0.0,
                      size_average=True, target_block_bytes=4 << 20):
    """predictions: (B, C, N) float logits (channels-first); targets: (B, N) int ids."""
    B, C, N = predictions.shape

    # class weights, mirroring the PyTorch module's alpha handling
    if alpha is None:
        w = jnp.ones((C, 1), jnp.float32)
    elif isinstance(alpha, (int, float)) and not isinstance(alpha, bool):
        if C != 2:
            raise ValueError("scalar alpha builds [alpha, 1-alpha]; requires C == 2")
        w = jnp.asarray([alpha, 1.0 - alpha], jnp.float32).reshape(C, 1)
    else:
        w = jnp.asarray(alpha, jnp.float32).reshape(C, 1)

    # narrow targets (logits dominate HBM traffic; targets are the secondary stream)
    tgt_dtype = jnp.int16 if C <= 32767 else jnp.int32
    tgt = targets.reshape(B, 1, N).astype(tgt_dtype)

    TB, TN, n_tiles = _pick_tiles(B, C, N, target_block_bytes)
    pad = n_tiles * TN - N
    preds = predictions
    if pad:
        # rare path (N has no 128-multiple divisor); padded lanes masked in-kernel
        preds = jnp.pad(preds, ((0, 0), (0, 0), (0, pad)))
        tgt = jnp.pad(tgt, ((0, 0), (0, 0), (0, pad)))

    single_tile = n_tiles == 1
    point_split = (B == 1 and n_tiles >= 2 and n_tiles % 2 == 0)

    if point_split:
        # B == 1: split the point axis into 2 parallel groups so both v7x TCs work
        G, T = 2, n_tiles // 2
        point_stride = T
        in_specs = [
            pl.BlockSpec((1, C, TN), lambda g, t: (0, 0, g * T + t)),
            pl.BlockSpec((1, 1, TN), lambda g, t: (0, 0, g * T + t)),
            pl.BlockSpec((C, 1), lambda g, t: (0, 0)),
        ]
    else:
        G, T = B // TB, n_tiles
        point_stride = 0
        in_specs = [
            # native (B, C, N): points on lanes, classes on sublanes, TB batches/step
            pl.BlockSpec((TB, C, TN), lambda g, t: (g, 0, t)),
            pl.BlockSpec((TB, 1, TN), lambda g, t: (g, 0, t)),
            pl.BlockSpec((C, 1), lambda g, t: (0, 0)),       # class weights (alpha)
        ]

    out_specs = pl.BlockSpec((pl.Squeezed(), 3, 1), lambda g, t: (g, 0, 0))
    scratch = [] if single_tile else [pltpu.VMEM((3, TN), jnp.float32)]

    kernel = functools.partial(
        _seg_loss_kernel, n_points=N, tile_n=TN, gamma=gamma,
        masked=pad > 0, point_stride=point_stride, single_tile=single_tile)

    # scoped-VMEM budget: double-buffered input blocks + scratch + slack
    tgt_isz = jnp.dtype(tgt_dtype).itemsize
    blk_bytes = TB * TN * (C * 4 + tgt_isz) + C * 4
    vmem_needed = 2 * blk_bytes + (0 if single_tile else 3 * TN * 4) + (256 << 10)
    vmem_limit = int(min(max(2 * vmem_needed, 16 << 20), 48 << 20))

    partials = pl.pallas_call(
        kernel,
        out_shape=jax.ShapeDtypeStruct((G, 3, 1), jnp.float32),
        grid_spec=pltpu.PrefetchScalarGridSpec(
            num_scalar_prefetch=0,
            grid=(G, T),
            in_specs=in_specs,
            out_specs=out_specs,
            scratch_shapes=scratch,
        ),
        compiler_params=pltpu.CompilerParams(
            dimension_semantics=("parallel", "arbitrary"),
            vmem_limit_bytes=vmem_limit),
    )(preds, tgt, w)

    sums = jnp.sum(partials[:, :, 0], axis=0)               # (3,)
    ce_loss = sums[0] / sums[1]                             # weighted-mean CE
    focal_sum = sums[2]
    n_pts = B * N
    if size_average:
        loss = (focal_sum / n_pts) * ce_loss
    else:
        loss = focal_sum * ce_loss
    # TODO(synk): dice=True branch (torch.unique-based dice loss) not implemented;
    # default construction uses dice=False so the forward pass above is complete.
    return loss


def _reference_loss(predictions, targets, alpha, gamma, size_average=True):
    """Pure-JAX reference mirroring the PyTorch forward exactly."""
    B, C, N = predictions.shape
    logits = jnp.transpose(predictions, (0, 2, 1)).reshape(-1, C)
    t = targets.reshape(-1)
    logp = jax.nn.log_softmax(logits, axis=-1)
    lp_t = jnp.take_along_axis(logp, t[:, None], axis=1)[:, 0]
    w = jnp.ones((C,), jnp.float32) if alpha is None else jnp.asarray(alpha, jnp.float32)
    w_t = w[t]
    ce = -(w_t * lp_t).sum() / w_t.sum()
    p_t = jnp.exp(lp_t)
    per_pt = (1.0 - p_t) ** gamma * ce
    return per_pt.mean() if size_average else per_pt.sum()


if __name__ == "__main__":
    key = jax.random.PRNGKey(0)
    B, C, N = 2, 4, 16                      # batch, classes, points
    k1, k2 = jax.random.split(key)
    predictions = jax.random.normal(k1, (B, C, N), dtype=jnp.float32)
    targets = jax.random.randint(k2, (B, N), 0, C, dtype=jnp.int32)

    alpha = [0.1, 0.2, 0.3, 0.4]            # deterministic class weights (module's `alpha`)
    gamma = 2.0

    loss = pointnet_seg_loss(predictions, targets, alpha=alpha, gamma=gamma,
                             size_average=True)
    loss = jax.block_until_ready(loss)

    ref = _reference_loss(predictions, targets, alpha, gamma, size_average=True)
    assert jnp.allclose(loss, ref, rtol=1e-5, atol=1e-6), (loss, ref)

    print("KERNEL_OK")
</pallas_src>

<mosaic_0001>
module attributes {stable_mosaic.version = 11 : i64} {
  func.func @_seg_loss_kernel(%arg0: i32, %arg1: i32, %arg2: memref<1x4x16xf32, #tpu.memory_space<vmem>>, %arg3: memref<1x1x16xi16, #tpu.memory_space<vmem>>, %arg4: memref<4x1xf32, #tpu.memory_space<vmem>>, %arg5: memref<1x3x1xf32, #tpu.memory_space<vmem>>) attributes {dimension_semantics = [#tpu.dimension_semantics<parallel>, #tpu.dimension_semantics<arbitrary>], iteration_bounds = array<i64: 2, 1>, scalar_prefetch = 0 : i64, scratch_operands = 0 : i64, tpu.core_type = #tpu.core_type<tc>, window_params = [{transform_indices = @transform_0, window_bounds = array<i64: 1, 4, 16>}, {transform_indices = @transform_1, window_bounds = array<i64: 1, 1, 16>}, {pipeline_mode = #tpu.pipeline_mode<synchronous>, transform_indices = @transform_2, window_bounds = array<i64: 4, 1>}, {transform_indices = @transform_3, window_bounds = array<i64: 1, 3, 1>}]} {
    %c0 = arith.constant 0 : index
    %c0_0 = arith.constant 0 : index
    %c0_1 = arith.constant 0 : index
    %0 = vector.load %arg2[%c0, %c0_0, %c0_1] : memref<1x4x16xf32, #tpu.memory_space<vmem>>, vector<1x4x16xf32>
    %c0_2 = arith.constant 0 : index
    %c0_3 = arith.constant 0 : index
    %c0_4 = arith.constant 0 : index
    %1 = vector.load %arg3[%c0_2, %c0_3, %c0_4] : memref<1x1x16xi16, #tpu.memory_space<vmem>>, vector<1x1x16xi16>
    %2 = arith.extsi %1 : vector<1x1x16xi16> to vector<1x1x16xi32>
    %c0_5 = arith.constant 0 : index
    %c0_6 = arith.constant 0 : index
    %3 = vector.load %arg4[%c0_5, %c0_6] : memref<4x1xf32, #tpu.memory_space<vmem>>, vector<4x1xf32>
    %4 = vector.shape_cast %3 : vector<4x1xf32> to vector<1x4x1xf32>
    %cst = arith.constant dense<0xFF800000> : vector<1x16xf32>
    %5 = vector.multi_reduction <maximumf>, %0, %cst [1] : vector<1x4x16xf32> to vector<1x16xf32>
    %6 = vector.shape_cast %5 : vector<1x16xf32> to vector<1x1x16xf32>
    %7 = vector.broadcast %6 : vector<1x1x16xf32> to vector<1x4x16xf32>
    %8 = arith.subf %0, %7 : vector<1x4x16xf32>
    %9 = math.exp %8 : vector<1x4x16xf32>
    %cst_7 = arith.constant dense<0.000000e+00> : vector<1x16xf32>
    %10 = vector.multi_reduction <add>, %9, %cst_7 [1] : vector<1x4x16xf32> to vector<1x16xf32>
    %11 = vector.shape_cast %10 : vector<1x16xf32> to vector<1x1x16xf32>
    %12 = math.log %11 : vector<1x1x16xf32>
    %13 = tpu.iota {dimensions = array<i32: 1>} : vector<1x4x16xi32>
    %14 = vector.broadcast %2 : vector<1x1x16xi32> to vector<1x4x16xi32>
    %15 = arith.cmpi eq, %13, %14 : vector<1x4x16xi32>
    %16 = arith.extui %15 : vector<1x4x16xi1> to vector<1x4x16xi32>
    %17 = arith.sitofp %16 : vector<1x4x16xi32> to vector<1x4x16xf32>
    %18 = arith.mulf %8, %17 : vector<1x4x16xf32>
    %cst_8 = arith.constant dense<0.000000e+00> : vector<1x16xf32>
    %19 = vector.multi_reduction <add>, %18, %cst_8 [1] : vector<1x4x16xf32> to vector<1x16xf32>
    %20 = vector.shape_cast %19 : vector<1x16xf32> to vector<1x1x16xf32>
    %21 = arith.mulf %9, %17 : vector<1x4x16xf32>
    %cst_9 = arith.constant dense<0.000000e+00> : vector<1x16xf32>
    %22 = vector.multi_reduction <add>, %21, %cst_9 [1] : vector<1x4x16xf32> to vector<1x16xf32>
    %23 = vector.shape_cast %22 : vector<1x16xf32> to vector<1x1x16xf32>
    %24 = vector.broadcast %4 : vector<1x4x1xf32> to vector<1x4x16xf32>
    %25 = arith.mulf %24, %17 : vector<1x4x16xf32>
    %cst_10 = arith.constant dense<0.000000e+00> : vector<1x16xf32>
    %26 = vector.multi_reduction <add>, %25, %cst_10 [1] : vector<1x4x16xf32> to vector<1x16xf32>
    %27 = vector.shape_cast %26 : vector<1x16xf32> to vector<1x1x16xf32>
    %28 = arith.subf %12, %20 : vector<1x1x16xf32>
    %29 = arith.divf %23, %11 : vector<1x1x16xf32>
    %cst_11 = arith.constant 1.000000e+00 : f32
    %30 = vector.broadcast %cst_11 : f32 to vector<1x1x16xf32>
    %31 = arith.subf %30, %29 : vector<1x1x16xf32>
    %cst_12 = arith.constant 0.000000e+00 : f32
    %32 = vector.broadcast %cst_12 : f32 to vector<1x1x16xf32>
    %33 = arith.maximumf %31, %32 : vector<1x1x16xf32>
    %34 = arith.mulf %33, %33 : vector<1x1x16xf32>
    %35 = arith.mulf %27, %28 : vector<1x1x16xf32>
    %cst_13 = arith.constant dense<0.000000e+00> : vector<1x16xf32>
    %36 = vector.multi_reduction <add>, %35, %cst_13 [0] : vector<1x1x16xf32> to vector<1x16xf32>
    %cst_14 = arith.constant dense<0.000000e+00> : vector<1x16xf32>
    %37 = vector.multi_reduction <add>, %27, %cst_14 [0] : vector<1x1x16xf32> to vector<1x16xf32>
    %cst_15 = arith.constant dense<0.000000e+00> : vector<1x16xf32>
    %38 = vector.multi_reduction <add>, %34, %cst_15 [0] : vector<1x1x16xf32> to vector<1x16xf32>
    %39 = tpu.concatenate %36, %37, %38 in 0 : vector<1x16xf32>, vector<1x16xf32>, vector<1x16xf32> -> vector<3x16xf32>
    %cst_16 = arith.constant dense<0.000000e+00> : vector<3xf32>
    %40 = vector.multi_reduction <add>, %39, %cst_16 [1] : vector<3x16xf32> to vector<3xf32>
    %41 = vector.shape_cast %40 : vector<3xf32> to vector<3x1xf32>
    %c0_17 = arith.constant 0 : index
    %c0_18 = arith.constant 0 : index
    %c0_19 = arith.constant 0 : index
    %42 = vector.load %arg5[%c0_17, %c0_18, %c0_19] : memref<1x3x1xf32, #tpu.memory_space<vmem>>, vector<1x3x1xf32>
    %43 = vector.shape_cast %42 : vector<1x3x1xf32> to vector<3x1xf32>
    %44 = vector.shape_cast %41 : vector<3x1xf32> to vector<1x3x1xf32>
    tpu.vector_store %arg5[%c0_17, %c0_18, %c0_19], %44 {strides = array<i32>} : memref<1x3x1xf32, #tpu.memory_space<vmem>>, vector<1x3x1xf32>,
    return
  }
  func.func @transform_0(%arg0: i32, %arg1: i32) -> (i32, i32, i32) {
    %c0_i32 = arith.constant 0 : i32
    %c0_i32_0 = arith.constant 0 : i32
    return %arg0, %c0_i32, %arg1 : i32, i32, i32
  }
  func.func @transform_1(%arg0: i32, %arg1: i32) -> (i32, i32, i32) {
    %c0_i32 = arith.constant 0 : i32
    %c0_i32_0 = arith.constant 0 : i32
    return %arg0, %c0_i32, %arg1 : i32, i32, i32
  }
  func.func @transform_2(%arg0: i32, %arg1: i32) -> (i32, i32) {
    %c0_i32 = arith.constant 0 : i32
    %c0_i32_0 = arith.constant 0 : i32
    %c0_i32_1 = arith.constant 0 : i32
    return %c0_i32, %c0_i32_0 : i32, i32
  }
  func.func @transform_3(%arg0: i32, %arg1: i32) -> (i32, i32, i32) {
    %c0_i32 = arith.constant 0 : i32
    %c0_i32_0 = arith.constant 0 : i32
    %c0_i32_1 = arith.constant 0 : i32
    return %arg0, %c0_i32, %c0_i32_0 : i32, i32, i32
  }
}

</mosaic_0001>

<llo_original>
// kernel: tpu_custom_call.1
$region0: #{tpu_custom_call.1}
  #allocation0 [shape = 'u32[]', space=smem, size = 0x4, offset = 0x4, fixed_abs, tag = 'smem constant byte address 0x4 - core index']
  #allocation1 [shape = 'u32[144,128]{1,0:T(1,128)}', space=vmem, size = 0x12000, scoped, tag = 'internal scratch']
  %s0 = inlined_call_operand.vmem [shape: f32[2,4,16], index: 0, kind: input, shape index: {}]
  %s1 = inlined_call_operand.vmem [shape: s16[2,1,16], index: 1, kind: input, shape index: {}]
  %s2 = inlined_call_operand.vmem [shape: f32[4,1], index: 2, kind: input, shape index: {}]
  %s3 = inlined_call_operand.vmem [shape: f32[2,3,1], index: 3, kind: output, shape index: {}]
  %s4 = sld [smem:[#allocation0]]
  $region45: #{tpu_custom_call.1} parent=0
    _
  %s6 = ssub.s32 1, %s4
  %s7 = scalar_select 0, %s6, %s4
  loop: start=0, step=1, limit=4
  $region2: #{tpu_custom_call.1} parent=0 // loop_pre_header
    _
  $region3: #{tpu_custom_call.1} parent=0 // loop_header
    %s9 = sphi 0, %s13
    %p10 = scmp.ge.s32.totalorder %s9, 4
    %s16 = sphi 0, %s28
    %s17 = sphi 0, %s24
    %s18 = sphi 0, %s16
    %s19 = sphi 0, %s17
    %s20 = sphi 0, %s18
    %s21 = sphi 0, %s19
    %s33 = sphi 0, %s35
    %s36 = sphi 0, %s33
    %s37 = sphi 0, %s36
    %s53 = sphi 0, %s37
    %s61 = sphi 0, %s63
    %s64 = sphi 0, %s61
    %s65 = sphi 0, %s64
    %s81 = sphi 0, %s65
    %s85 = sphi 0, %s85
    %s87 = sphi 0, %s85
    %s88 = sphi 0, %s87
    %s102 = sphi 0, %s88
    %s108 = sphi 0, %s110
    %s111 = sphi 0, %s108
    %s112 = sphi 0, %s111
    %s128 = sphi 0, %s112
  $region4: #{tpu_custom_call.1} parent=0 // loop_header_branch
    %12 = sbr.rel (%p10) target = $region8
  $region5: #{tpu_custom_call.1} parent=0 // loop_body
    %s14 = ssub.s32 %s9, 1
    %s15 = ssub.s32 %s9, 2
    %s22 = sadd.s32 1, %s17
    %p23 = scmp.ge.s32.totalorder %s22, 1
    %s24 = scalar_select %p23, 0, %s22
    %s25 = sadd.s32 1, %s16
    %s26 = scalar_select %p23, %s25, %s16
    %p27 = scmp.ge.s32.totalorder %s26, 2
    %s28 = scalar_select %p27, 0, %s26
    %s29 = ssub.s32 %s16, %s28
    %s30 = ssub.s32 %s17, %s24
    %s31 = sor.u32 %s29, %s30
    %p32 = scmp.eq.s32.totalorder %s31, 0
    %s34 = sadd.s32 %s33, 1
    %s35 = scalar_select %p32, %s33, %s34
    %p38 = pneg %p32
    %p39 = scmp.eq.s32.totalorder %s9, 1
    %p40 = por %p38, %p39
    %p41 = scmp.ne.s32.totalorder %s33, %s36
    %p42 = scmp.eq.s32.totalorder %s9, 0
    %p43 = por %p41, %p42
    %p44 = scmp.ne.s32.totalorder %s33, %s36
    %p45 = scmp.eq.s32.totalorder %s14, 1
    %p46 = por %p44, %p45
    %p47 = scmp.ne.s32.totalorder %s36, %s37
    %p48 = scmp.eq.s32.totalorder %s14, 0
    %p49 = por %p47, %p48
    %p50 = scmp.ne.s32.totalorder %s36, %s37
    %p51 = scmp.eq.s32.totalorder %s15, 1
    %p52 = por %p50, %p51
    %p54 = scmp.ne.s32.totalorder %s37, %s53
    %p55 = scmp.eq.s32.totalorder %s15, 0
    %p56 = por %p54, %p55
    %s57 = ssub.s32 %s16, %s28
    %s58 = ssub.s32 %s17, %s24
    %s59 = sor.u32 %s57, %s58
    %p60 = scmp.eq.s32.totalorder %s59, 0
    %s62 = sadd.s32 %s61, 1
    %s63 = scalar_select %p60, %s61, %s62
    %p66 = pneg %p60
    %p67 = scmp.eq.s32.totalorder %s9, 1
    %p68 = por %p66, %p67
    %p69 = scmp.ne.s32.totalorder %s61, %s64
    %p70 = scmp.eq.s32.totalorder %s9, 0
    %p71 = por %p69, %p70
    %p72 = scmp.ne.s32.totalorder %s61, %s64
    %p73 = scmp.eq.s32.totalorder %s14, 1
    %p74 = por %p72, %p73
    %p75 = scmp.ne.s32.totalorder %s64, %s65
    %p76 = scmp.eq.s32.totalorder %s14, 0
    %p77 = por %p75, %p76
    %p78 = scmp.ne.s32.totalorder %s64, %s65
    %p79 = scmp.eq.s32.totalorder %s15, 1
    %p80 = por %p78, %p79
    %p82 = scmp.ne.s32.totalorder %s65, %s81
    %p83 = scmp.eq.s32.totalorder %s15, 0
    %p84 = por %p82, %p83
    %s86 = sadd.s32 %s85, 1
    %p89 = scmp.eq.s32.totalorder %s9, 1
    %p90 = scmp.ne.s32.totalorder %s85, %s87
    %p91 = scmp.eq.s32.totalorder %s9, 0
    %p92 = por %p90, %p91
    %p93 = scmp.ne.s32.totalorder %s85, %s87
    %p94 = scmp.eq.s32.totalorder %s14, 1
    %p95 = por %p93, %p94
    %p96 = scmp.ne.s32.totalorder %s87, %s88
    %p97 = scmp.eq.s32.totalorder %s14, 0
    %p98 = por %p96, %p97
    %p99 = scmp.ne.s32.totalorder %s87, %s88
    %p100 = scmp.eq.s32.totalorder %s15, 1
    %p101 = por %p99, %p100
    %p103 = scmp.ne.s32.totalorder %s88, %s102
    %p104 = scmp.eq.s32.totalorder %s15, 0
    %p105 = por %p103, %p104
    %s106 = ssub.s32 %s16, %s28
    %p107 = scmp.eq.s32.totalorder %s106, 0
    %s109 = sadd.s32 %s108, 1
    %s110 = scalar_select %p107, %s108, %s109
    %p113 = pneg %p107
    %p114 = scmp.eq.s32.totalorder %s9, 1
    %p115 = por %p113, %p114
    %p116 = scmp.ne.s32.totalorder %s108, %s111
    %p117 = scmp.eq.s32.totalorder %s9, 0
    %p118 = por %p116, %p117
    %p119 = scmp.ne.s32.totalorder %s108, %s111
    %p120 = scmp.eq.s32.totalorder %s14, 1
    %p121 = por %p119, %p120
    %p122 = scmp.ne.s32.totalorder %s111, %s112
    %p123 = scmp.eq.s32.totalorder %s14, 0
    %p124 = por %p122, %p123
    %p125 = scmp.ne.s32.totalorder %s111, %s112
    %p126 = scmp.eq.s32.totalorder %s15, 1
    %p127 = por %p125, %p126
    %p129 = scmp.ne.s32.totalorder %s112, %s128
    %p130 = scmp.eq.s32.totalorder %s15, 0
    %p131 = por %p129, %p130
    %p132 = scmp.le.s32.totalorder 1, %s9
    %p133 = scmp.lt.s32.totalorder %s9, 3
    %p134 = pnand %p132, %p133
    %p135 = pneg %p134
    // Predicated region
    $region9: #{tpu_custom_call.1} parent=5 // pred_check
      _
    $region10: #{tpu_custom_call.1} parent=5 // pred_check_branch
      %137 = sbr.rel (%p134) target = $region12
    $region11: #{tpu_custom_call.1} parent=5 // pred_region
      %s138 = ssub.s32 %s9, 1
      // Predicated region
      $region13: #{tpu_custom_call.1} parent=11 // pred_check
        %p139 = pneg %p98
      $region14: #{tpu_custom_call.1} parent=11 // pred_check_branch
        %141 = sbr.rel (%p139) target = $region16
      $region15: #{tpu_custom_call.1} parent=11 // pred_region
        _
      $region16: #{tpu_custom_call.1} parent=11 // pred_fallthru
        _
    $region12: #{tpu_custom_call.1} parent=5 // pred_fallthru
      _
    %p142 = scmp.lt.s32.totalorder %s9, 2
    // Predicated region
    $region17: #{tpu_custom_call.1} parent=5 // pred_check
      %p143 = pneg %p142
    $region18: #{tpu_custom_call.1} parent=5 // pred_check_branch
      %145 = sbr.rel (%p143) target = $region20
    $region19: #{tpu_custom_call.1} parent=5 // pred_region
      // Predicated region
      $region21: #{tpu_custom_call.1} parent=19 // pred_check
        %p146 = pneg %p43
      $region22: #{tpu_custom_call.1} parent=19 // pred_check_branch
        %148 = sbr.rel (%p146) target = $region24
      $region23: #{tpu_custom_call.1} parent=19 // pred_region
        %p149 = scmp.lt.s32.totalorder %s16, 1
        %s150 = scalar_select %p149, %s16, 1
        %p151 = scmp.lt.s32.totalorder %s17, 0
        %s152 = scalar_select %p151, %s17, 0
        %s153 = sadd.s32 %s152, %s150
        %s154 = smul.addr %s153, 4
        %s155 = scalar_lea.vmem %s0, %s154
      $region24: #{tpu_custom_call.1} parent=19 // pred_fallthru
        _
      // Predicated region
      $region25: #{tpu_custom_call.1} parent=19 // pred_check
        %p156 = pneg %p71
      $region26: #{tpu_custom_call.1} parent=19 // pred_check_branch
        %158 = sbr.rel (%p156) target = $region28
      $region27: #{tpu_custom_call.1} parent=19 // pred_region
        %p159 = scmp.lt.s32.totalorder %s16, 1
        %s160 = scalar_select %p159, %s16, 1
        %p161 = scmp.lt.s32.totalorder %s17, 0
        %s162 = scalar_select %p161, %s17, 0
        %s163 = sadd.s32 %s162, %s160
        %s164 = scalar_lea.vmem %s1, %s163
      $region28: #{tpu_custom_call.1} parent=19 // pred_fallthru
        _
    $region20: #{tpu_custom_call.1} parent=5 // pred_fallthru
      _
    %p165 = scmp.le.s32.totalorder 1, %s9
    %p166 = scmp.lt.s32.totalorder %s9, 3
    %p167 = pnand %p165, %p166
    %p168 = pneg %p167
    // Predicated region
    $region29: #{tpu_custom_call.1} parent=5 // pred_check
      _
    $region30: #{tpu_custom_call.1} parent=5 // pred_check_branch
      %170 = sbr.rel (%p167) target = $region32
    $region31: #{tpu_custom_call.1} parent=5 // pred_region
      %s171 = ssub.s32 %s9, 1
      %p172 = scmp.lt.s32.totalorder %s18, 1
      %s173 = scalar_select %p172, %s18, 1
      %p174 = scmp.lt.s32.totalorder %s19, 0
      %s175 = scalar_select %p174, %s19, 0
      %s176 = sadd.s32 %s175, %s173
      %s177 = smul.addr %s176, 4
      %s178 = scalar_lea.vmem %s0, %s177
      %p179 = pneg %p49
      %p180 = pneg %p46
      %p181 = scmp.lt.s32.totalorder %s18, 1
      %s182 = scalar_select %p181, %s18, 1
      %p183 = scmp.lt.s32.totalorder %s19, 0
      %s184 = scalar_select %p183, %s19, 0
      %s185 = sadd.s32 %s184, %s182
      %s186 = scalar_lea.vmem %s1, %s185
      %p187 = pneg %p77
      %p188 = pneg %p74
      %p189 = pneg %p98
      %p190 = pneg %p95
      %p191 = pneg %p124
      %p192 = pneg %p121
      %p193 = scmp.lt.s32.totalorder %s18, 1
      %s194 = scalar_select %p193, %s18, 1
      %s195 = smul.addr %s194, 4
      %s196 = scalar_lea.vmem %s3, %s195
      %p197 = scmp.lt.s32.totalorder %s18, 1
      %s198 = scalar_select %p197, %s18, 1
      %p199 = scmp.lt.s32.totalorder %s19, 0
      %s200 = scalar_select %p199, %s19, 0
      %s201 = sadd.s32 %s200, %s198
      %s202 = smul.addr %s201, 4
      %s203 = scalar_lea.vmem %s0, %s202
      %p204 = scmp.lt.s32.totalorder %s18, 1
      %s205 = scalar_select %p204, %s18, 1
      %p206 = scmp.lt.s32.totalorder %s19, 0
      %s207 = scalar_select %p206, %s19, 0
      %s208 = sadd.s32 %s207, %s205
      %s209 = scalar_lea.vmem %s1, %s208
      %p210 = scmp.lt.s32.totalorder %s18, 1
      %s211 = scalar_select %p210, %s18, 1
      %s212 = smul.addr %s211, 4
      %s213 = scalar_lea.vmem %s3, %s212
      %v214 = vld [vmem:[%s203] sm:$0xf]
      %v215 = vld [vmem:[%s209] sm:$0x1]
      %v216 = vunpack.c.l.b16 %v215
      %v217 = vld [vmem:[%s2] sm:$0xf]
      %vm218 = vcmask 125952
      %v219 = vsel %vm218, %v214, -inf
      %v220 = vrot.slane %v219, 4
      %v221 = vmax.f32 %v219, %v220
      %v222 = vrot.slane %v221, 2
      %v223 = vmax.f32 %v221, %v222
      %v224 = vrot.slane %v223, 1
      %v225 = vmax.f32 %v223, %v224
      %v226 = vsub.f32 %v214, %v225
      %v227 = vmul.f32 %v226, 1.442695
      %v228 = vpow.pop %v227
      %v229 = vsel %vm218, %v228, 0.0
      %v230 = vrot.slane %v229, 4
      %v231 = vadd.f32 %v229, %v230
      %v232 = vrot.slane %v231, 2
      %v233 = vadd.f32 %v231, %v232
      %v234 = vrot.slane %v233, 1
      %v235 = vadd.f32 %v233, %v234
      %v236 = vlog2.pop %v235
      %v237 = vmul.f32 %v236, 0.6931472
      %v238 = vlaneseq
      %v239 = vshrl.u32 %v238, 7
      %v240 = vlaneseq
      %v241 = vshrl.u32 %v240, 7
      %v242 = vsub.s32 0, %v241
      %v243 = vrot.slane %v216, %v242
      %vm244 = vcmp.eq.s32.totalorder %v239, %v243
      %v245 = vsel %vm244, 1, 0
      %v246 = vcvt.s32.f32 %v245
      %v247 = vmul.f32 %v226, %v246
      %v248 = vsel %vm218, %v247, 0.0
      %v249 = vrot.slane %v248, 4
      %v250 = vadd.f32 %v248, %v249
      %v251 = vrot.slane %v250, 2
      %v252 = vadd.f32 %v250, %v251
      %v253 = vrot.slane %v252, 1
      %v254 = vadd.f32 %v252, %v253
      %v255 = vmul.f32 %v228, %v246
      %v256 = vsel %vm218, %v255, 0.0
      %v257 = vrot.slane %v256, 4
      %v258 = vadd.f32 %v256, %v257
      %v259 = vrot.slane %v258, 2
      %v260 = vadd.f32 %v258, %v259
      %v261 = vrot.slane %v260, 1
      %v262 = vadd.f32 %v260, %v261
      %264 = vset.pattern.permute.xlu0 0
      %265 = vperm.xlu0 %264, %v217
      %v266 = vpop.permute.xlu0 %265
      %v268 = vmul.f32 %v266, %v246
      %v269 = vsel %vm218, %v268, 0.0
      %v270 = vrot.slane %v269, 4
      %v271 = vadd.f32 %v269, %v270
      %v272 = vrot.slane %v271, 2
      %v273 = vadd.f32 %v271, %v272
      %v274 = vrot.slane %v273, 1
      %v275 = vadd.f32 %v273, %v274
      %v276 = vsub.f32 %v237, %v254
      %v277 = vrcp.pop %v235
      %v278 = vmul.f32 %v262, %v277
      %v279 = vsub.f32 1.0, %v278
      %v280 = vmax.f32 %v279, 0.0
      %v281 = vmul.f32 %v280, %v280
      %v282 = vmul.f32 %v275, %v276
      %v283 = vadd.f32 %v282, 0.0
      %v284 = vadd.f32 %v275, 0.0
      %v285 = vadd.f32 %v281, 0.0
      %vm286 = vcmask 1040384
      %v287 = vsel %vm286, %v283, %v284
      %vm288 = vcmask 1041408
      %v289 = vsel %vm288, %v287, %v285
      %vm290 = vcmask 124928
      %v291 = vsel %vm290, %v289, 0.0
      %292 = vadd.xlane.f32.xlu0 %v291
      %v293 = vpop.xlane.xlu0 %292
      %vm294 = vcmask 2048
      %295 = vst.msk [vmem:[%s213] sm:$0x7] %vm294, %v293
      %p296 = scmp.lt.s32.totalorder %s18, 1
      %s297 = scalar_select %p296, %s18, 1
      %s298 = smul.addr %s297, 4
      %s299 = scalar_lea.vmem %s3, %s298
      // Predicated region
      $region33: #{tpu_custom_call.1} parent=31 // pred_check
        %p300 = pneg %p121
      $region34: #{tpu_custom_call.1} parent=31 // pred_check_branch
        %302 = sbr.rel (%p300) target = $region36
      $region35: #{tpu_custom_call.1} parent=31 // pred_region
        _
      $region36: #{tpu_custom_call.1} parent=31 // pred_fallthru
        _
    $region32: #{tpu_custom_call.1} parent=5 // pred_fallthru
      _
    %p303 = scmp.le.s32.totalorder 2, %s9
    // Predicated region
    $region37: #{tpu_custom_call.1} parent=5 // pred_check
      %p304 = pneg %p303
    $region38: #{tpu_custom_call.1} parent=5 // pred_check_branch
      %306 = sbr.rel (%p304) target = $region40
    $region39: #{tpu_custom_call.1} parent=5 // pred_region
      %s307 = ssub.s32 %s9, 2
      // Predicated region
      $region41: #{tpu_custom_call.1} parent=39 // pred_check
        %p308 = pneg %p127
      $region42: #{tpu_custom_call.1} parent=39 // pred_check_branch
        %310 = sbr.rel (%p308) target = $region44
      $region43: #{tpu_custom_call.1} parent=39 // pred_region
        %p311 = scmp.lt.s32.totalorder %s20, 1
        %s312 = scalar_select %p311, %s20, 1
        %s313 = smul.addr %s312, 4
        %s314 = scalar_lea.vmem %s3, %s313
      $region44: #{tpu_custom_call.1} parent=39 // pred_fallthru
        _
    $region40: #{tpu_custom_call.1} parent=5 // pred_fallthru
      _
  $region6: #{tpu_custom_call.1} parent=0 // loop_footer
    %s13 = sadd.s32 1, %s9
  $region7: #{tpu_custom_call.1} parent=0 // loop_footer_branch
    %8 = sbr.rel target = $region3
  $region8: #{tpu_custom_call.1} parent=0 // loop_exit
    _

</llo_original>
